<compile_context>
chip_gen: v7x
topology: tpu7x:2x2x1
jax: 0.10.0
libtpu: 0.0.40
codegen_flags: <defaults>
</compile_context>

<pallas_src>
import jax
import jax.numpy as jnp
from jax.experimental import pallas as pl
from jax.experimental.pallas import tpu as pltpu

LANE = 128
SUBLANE = 8


def _round_up(v, m):
    return ((v + m - 1) // m) * m


def mlp_kernel(x_ref, w1_ref, b1_ref, w2_ref, b2_ref, w3_ref, b3_ref, o_ref):
    # Layer 1: [TB, n] @ [n, 128] + [1, 128] -> ReLU   (bf16 inputs, f32 accumulate)
    x = x_ref[...].astype(jnp.bfloat16)
    h1 = jnp.dot(x, w1_ref[...], preferred_element_type=jnp.float32)
    h1 = jnp.maximum(h1 + b1_ref[...], 0.0)
    # Layer 2: [TB, 128] @ [128, 256] + [1, 256] -> ReLU
    h2 = jnp.dot(h1.astype(jnp.bfloat16), w2_ref[...],
                 preferred_element_type=jnp.float32)
    h2 = jnp.maximum(h2 + b2_ref[...], 0.0)
    # Layer 3: [TB, 256] @ [256, 128(pad)] + [1, 128(pad)], lane-aligned on the
    # MXU, then keep only the first (m+1) columns for the narrow HBM output.
    out = jnp.dot(h2.astype(jnp.bfloat16), w3_ref[...],
                  preferred_element_type=jnp.float32)
    out = out + b3_ref[...]
    o_ref[...] = out[:, : o_ref.shape[-1]]


def full_two_thinning_net(x, params, *, block_batch=4096):
    """Forward pass of FullTwoThinningNet. x: [batch, n]; returns [batch, m+1] f32."""
    w1, b1, w2, b2, w3, b3 = params
    batch, n = x.shape
    out_dim = w3.shape[1]                    # m + 1
    w3_pad = _round_up(out_dim, LANE)

    # Zero-pad the final-layer weights/bias columns to a lane multiple so the
    # last matmul is 128-aligned.  These are VMEM-resident (DMA'd once), so the
    # padding costs nothing per step; the kernel slices back before the store.
    w3 = jnp.pad(w3, ((0, 0), (0, w3_pad - out_dim)))
    b3 = jnp.pad(b3, ((0, 0), (0, w3_pad - out_dim)))

    # bf16 weights (MXU-native), f32 biases (bias-add / ReLU stay f32 on VPU).
    w1, w2, w3 = (w.astype(jnp.bfloat16) for w in (w1, w2, w3))
    b1, b2, b3 = (b.astype(jnp.float32) for b in (b1, b2, b3))
    x = x.astype(jnp.float32)

    # Batch tile: large (amortizes per-grid-step overhead), a multiple of 8
    # sublanes, and chosen so the grid has >= 2 tiles when batch allows it
    # (megacore utilization on v7x).  No batch padding: cdiv grid + edge-block
    # clipping handles the remainder.
    tb = _round_up(min(block_batch, _round_up(pl.cdiv(batch, 2), SUBLANE)), SUBLANE)
    grid = (pl.cdiv(batch, tb),)

    def resident(a):  # same block every grid step -> stays VMEM-resident
        return pl.BlockSpec(a.shape, lambda i: (0,) * a.ndim)

    out = pl.pallas_call(
        mlp_kernel,
        out_shape=jax.ShapeDtypeStruct((batch, out_dim), jnp.float32),
        grid_spec=pl.GridSpec(
            grid=grid,
            in_specs=[
                pl.BlockSpec((tb, n), lambda i: (i, 0)),   # x: tiled over batch
                resident(w1), resident(b1),
                resident(w2), resident(b2),
                resident(w3), resident(b3),
            ],
            # Narrow (m+1)-wide output: ~20 B/row HBM writeback, no wrapper slice.
            out_specs=pl.BlockSpec((tb, out_dim), lambda i: (i, 0)),
        ),
        compiler_params=pltpu.CompilerParams(
            dimension_semantics=("parallel",),       # megacore sharding on v7x
            vmem_limit_bytes=48 * 1024 * 1024,       # sized for v7x's 64 MiB VMEM
        ),
    )(x, w1, b1, w2, b2, w3, b3)

    return out


def init_params(key, n, m):
    """Deterministic init matching PyTorch nn.Linear's U(-1/sqrt(fan_in), 1/sqrt(fan_in))."""
    dims = [(n, 128), (128, 256), (256, m + 1)]
    params = []
    for (fan_in, fan_out) in dims:
        key, kw, kb = jax.random.split(key, 3)
        bound = 1.0 / jnp.sqrt(jnp.float32(fan_in))
        w = jax.random.uniform(kw, (fan_in, fan_out), jnp.float32, -bound, bound)
        b = jax.random.uniform(kb, (1, fan_out), jnp.float32, -bound, bound)
        params.extend([w, b])
    return tuple(params)


def reference_forward(x, params):
    """Pure-JAX reference mirroring the kernel's bf16-weight / f32-accumulate math."""
    w1, b1, w2, b2, w3, b3 = params
    bf = jnp.bfloat16
    h1 = jnp.dot(x.astype(bf), w1.astype(bf),
                 preferred_element_type=jnp.float32) + b1
    h1 = jnp.maximum(h1, 0.0)
    h2 = jnp.dot(h1.astype(bf), w2.astype(bf),
                 preferred_element_type=jnp.float32) + b2
    h2 = jnp.maximum(h2, 0.0)
    return jnp.dot(h2.astype(bf), w3.astype(bf),
                   preferred_element_type=jnp.float32) + b3


if __name__ == "__main__":
    n, m = 8, 4          # n bins of load info -> m+1 threshold outputs
    batch = 2

    key = jax.random.PRNGKey(0)
    key, kx = jax.random.split(key)
    # Load vectors (counts); small non-negative floats.
    x = jax.random.uniform(kx, (batch, n), jnp.float32, 0.0, float(m))
    params = init_params(key, n, m)

    out = jax.block_until_ready(full_two_thinning_net(x, params))
    ref = reference_forward(x, params)
    assert out.shape == (batch, m + 1), out.shape
    assert jnp.allclose(out, ref, atol=1e-2, rtol=1e-2), "mismatch vs reference (batch=2)"

    # Multi-tile grid + partial edge block (300 = 2*128 + 44), no wrapper padding.
    key, kx2 = jax.random.split(key)
    x2 = jax.random.uniform(kx2, (300, n), jnp.float32, 0.0, float(m))
    out2 = jax.block_until_ready(full_two_thinning_net(x2, params, block_batch=128))
    ref2 = reference_forward(x2, params)
    assert out2.shape == (300, m + 1), out2.shape
    assert jnp.allclose(out2, ref2, atol=1e-2, rtol=1e-2), "mismatch vs reference (batch=300)"

    print("KERNEL_OK")
</pallas_src>

<mosaic_0001>
module attributes {stable_mosaic.version = 11 : i64} {
  func.func @mlp_kernel(%arg0: i32, %arg1: memref<8x8xf32, #tpu.memory_space<vmem>>, %arg2: memref<8x128xbf16, #tpu.memory_space<vmem>>, %arg3: memref<1x128xf32, #tpu.memory_space<vmem>>, %arg4: memref<128x256xbf16, #tpu.memory_space<vmem>>, %arg5: memref<1x256xf32, #tpu.memory_space<vmem>>, %arg6: memref<256x128xbf16, #tpu.memory_space<vmem>>, %arg7: memref<1x128xf32, #tpu.memory_space<vmem>>, %arg8: memref<8x5xf32, #tpu.memory_space<vmem>>) attributes {dimension_semantics = [#tpu.dimension_semantics<parallel>], iteration_bounds = array<i64: 1>, scalar_prefetch = 0 : i64, scratch_operands = 0 : i64, tpu.core_type = #tpu.core_type<tc>, window_params = [{transform_indices = @transform_0, window_bounds = array<i64: 8, 8>}, {pipeline_mode = #tpu.pipeline_mode<synchronous>, transform_indices = @transform_1, window_bounds = array<i64: 8, 128>}, {pipeline_mode = #tpu.pipeline_mode<synchronous>, transform_indices = @transform_2, window_bounds = array<i64: 1, 128>}, {pipeline_mode = #tpu.pipeline_mode<synchronous>, transform_indices = @transform_3, window_bounds = array<i64: 128, 256>}, {pipeline_mode = #tpu.pipeline_mode<synchronous>, transform_indices = @transform_4, window_bounds = array<i64: 1, 256>}, {pipeline_mode = #tpu.pipeline_mode<synchronous>, transform_indices = @transform_5, window_bounds = array<i64: 256, 128>}, {pipeline_mode = #tpu.pipeline_mode<synchronous>, transform_indices = @transform_6, window_bounds = array<i64: 1, 128>}, {transform_indices = @transform_7, window_bounds = array<i64: 8, 5>}]} {
    %c0 = arith.constant 0 : index
    %c0_0 = arith.constant 0 : index
    %0 = vector.load %arg1[%c0, %c0_0] : memref<8x8xf32, #tpu.memory_space<vmem>>, vector<8x8xf32>
    %1 = arith.truncf %0 : vector<8x8xf32> to vector<8x8xbf16>
    %c0_1 = arith.constant 0 : index
    %c0_2 = arith.constant 0 : index
    %2 = vector.load %arg2[%c0_1, %c0_2] : memref<8x128xbf16, #tpu.memory_space<vmem>>, vector<8x128xbf16>
    %cst = arith.constant dense<0.000000e+00> : vector<8x128xf32>
    %3 = tpu.matmul %1, %2, %cst {dimension_numbers = #tpu.dot_dimension_numbers<[1], [0], [0], [1], [0, 0, 1, 1], [], []>} : vector<8x8xbf16>, vector<8x128xbf16>, vector<8x128xf32> -> vector<8x128xf32>
    %c0_3 = arith.constant 0 : index
    %c0_4 = arith.constant 0 : index
    %4 = vector.load %arg3[%c0_3, %c0_4] : memref<1x128xf32, #tpu.memory_space<vmem>>, vector<1x128xf32>
    %5 = vector.broadcast %4 : vector<1x128xf32> to vector<8x128xf32>
    %6 = arith.addf %3, %5 : vector<8x128xf32>
    %cst_5 = arith.constant 0.000000e+00 : f32
    %7 = vector.broadcast %cst_5 : f32 to vector<8x128xf32>
    %8 = arith.maximumf %6, %7 : vector<8x128xf32>
    %9 = arith.truncf %8 : vector<8x128xf32> to vector<8x128xbf16>
    %c0_6 = arith.constant 0 : index
    %c0_7 = arith.constant 0 : index
    %10 = vector.load %arg4[%c0_6, %c0_7] : memref<128x256xbf16, #tpu.memory_space<vmem>>, vector<128x256xbf16>
    %cst_8 = arith.constant dense<0.000000e+00> : vector<8x256xf32>
    %11 = tpu.matmul %9, %10, %cst_8 {dimension_numbers = #tpu.dot_dimension_numbers<[1], [0], [0], [1], [0, 0, 1, 1], [], []>} : vector<8x128xbf16>, vector<128x256xbf16>, vector<8x256xf32> -> vector<8x256xf32>
    %c0_9 = arith.constant 0 : index
    %c0_10 = arith.constant 0 : index
    %12 = vector.load %arg5[%c0_9, %c0_10] : memref<1x256xf32, #tpu.memory_space<vmem>>, vector<1x256xf32>
    %13 = vector.broadcast %12 : vector<1x256xf32> to vector<8x256xf32>
    %14 = arith.addf %11, %13 : vector<8x256xf32>
    %cst_11 = arith.constant 0.000000e+00 : f32
    %15 = vector.broadcast %cst_11 : f32 to vector<8x256xf32>
    %16 = arith.maximumf %14, %15 : vector<8x256xf32>
    %17 = arith.truncf %16 : vector<8x256xf32> to vector<8x256xbf16>
    %c0_12 = arith.constant 0 : index
    %c0_13 = arith.constant 0 : index
    %18 = vector.load %arg6[%c0_12, %c0_13] : memref<256x128xbf16, #tpu.memory_space<vmem>>, vector<256x128xbf16>
    %cst_14 = arith.constant dense<0.000000e+00> : vector<8x128xf32>
    %19 = tpu.matmul %17, %18, %cst_14 {dimension_numbers = #tpu.dot_dimension_numbers<[1], [0], [0], [1], [0, 0, 1, 1], [], []>} : vector<8x256xbf16>, vector<256x128xbf16>, vector<8x128xf32> -> vector<8x128xf32>
    %c0_15 = arith.constant 0 : index
    %c0_16 = arith.constant 0 : index
    %20 = vector.load %arg7[%c0_15, %c0_16] : memref<1x128xf32, #tpu.memory_space<vmem>>, vector<1x128xf32>
    %21 = vector.broadcast %20 : vector<1x128xf32> to vector<8x128xf32>
    %22 = arith.addf %19, %21 : vector<8x128xf32>
    %23 = vector.extract_strided_slice %22 {offsets = [0, 0], sizes = [8, 5], strides = [1, 1]} : vector<8x128xf32> to vector<8x5xf32>
    %c0_17 = arith.constant 0 : index
    %c0_18 = arith.constant 0 : index
    %24 = vector.load %arg8[%c0_17, %c0_18] : memref<8x5xf32, #tpu.memory_space<vmem>>, vector<8x5xf32>
    tpu.vector_store %arg8[%c0_17, %c0_18], %23 {strides = array<i32>} : memref<8x5xf32, #tpu.memory_space<vmem>>, vector<8x5xf32>,
    return
  }
  func.func @transform_0(%arg0: i32) -> (i32, i32) {
    %c0_i32 = arith.constant 0 : i32
    %c0_i32_0 = arith.constant 0 : i32
    return %arg0, %c0_i32 : i32, i32
  }
  func.func @transform_1(%arg0: i32) -> (i32, i32) {
    %c0_i32 = arith.constant 0 : i32
    %c0_i32_0 = arith.constant 0 : i32
    %c0_i32_1 = arith.constant 0 : i32
    return %c0_i32, %c0_i32_0 : i32, i32
  }
  func.func @transform_2(%arg0: i32) -> (i32, i32) {
    %c0_i32 = arith.constant 0 : i32
    %c0_i32_0 = arith.constant 0 : i32
    %c0_i32_1 = arith.constant 0 : i32
    return %c0_i32, %c0_i32_0 : i32, i32
  }
  func.func @transform_3(%arg0: i32) -> (i32, i32) {
    %c0_i32 = arith.constant 0 : i32
    %c0_i32_0 = arith.constant 0 : i32
    %c0_i32_1 = arith.constant 0 : i32
    return %c0_i32, %c0_i32_0 : i32, i32
  }
  func.func @transform_4(%arg0: i32) -> (i32, i32) {
    %c0_i32 = arith.constant 0 : i32
    %c0_i32_0 = arith.constant 0 : i32
    %c0_i32_1 = arith.constant 0 : i32
    return %c0_i32, %c0_i32_0 : i32, i32
  }
  func.func @transform_5(%arg0: i32) -> (i32, i32) {
    %c0_i32 = arith.constant 0 : i32
    %c0_i32_0 = arith.constant 0 : i32
    %c0_i32_1 = arith.constant 0 : i32
    return %c0_i32, %c0_i32_0 : i32, i32
  }
  func.func @transform_6(%arg0: i32) -> (i32, i32) {
    %c0_i32 = arith.constant 0 : i32
    %c0_i32_0 = arith.constant 0 : i32
    %c0_i32_1 = arith.constant 0 : i32
    return %c0_i32, %c0_i32_0 : i32, i32
  }
  func.func @transform_7(%arg0: i32) -> (i32, i32) {
    %c0_i32 = arith.constant 0 : i32
    %c0_i32_0 = arith.constant 0 : i32
    return %arg0, %c0_i32 : i32, i32
  }
}

</mosaic_0001>

<llo_original>
// kernel: tpu_custom_call.1
$region0: #{tpu_custom_call.1}
  #allocation0 [shape = 'u32[]', space=smem, size = 0x4, offset = 0x4, fixed_abs, tag = 'smem constant byte address 0x4 - core index']
  #allocation1 [shape = 'u32[144,128]{1,0:T(1,128)}', space=vmem, size = 0x12000, scoped, tag = 'internal scratch']
  %s0 = inlined_call_operand.hbm [shape: f32[2,8], index: 0, kind: input, shape index: {}]
  %s1 = inlined_call_operand.hbm [shape: bf16[8,128], index: 1, kind: input, shape index: {}]
  %s2 = inlined_call_operand.vmem [shape: f32[1,128], index: 2, kind: input, shape index: {}]
  %s3 = inlined_call_operand.hbm [shape: bf16[128,256], index: 3, kind: input, shape index: {}]
  %s4 = inlined_call_operand.vmem [shape: f32[1,256], index: 4, kind: input, shape index: {}]
  %s5 = inlined_call_operand.hbm [shape: bf16[256,128], index: 5, kind: input, shape index: {}]
  %s6 = inlined_call_operand.vmem [shape: f32[1,128], index: 6, kind: input, shape index: {}]
  %s7 = inlined_call_operand.hbm [shape: f32[2,5], index: 7, kind: output, shape index: {}]
  %s8 = sld [smem:[#allocation0]]
  $region54: #{tpu_custom_call.1} parent=0
    _
  %s10 = ssub.s32 1, %s8
  %s11 = scalar_select 0, %s10, %s8
  $region1: #{tpu_custom_call.1} parent=0
    #allocation2 [shape = 'u8[4096]{0}', space=vmem, size = 0x1000, scoped, tag = 'input window, operand 0, single buffered']
    #allocation3 [shape = 's32[1]{0}', space=sflag, size = 0x4, scoped, tag = 'scoped memory for tpu_custom_call.1']
    #allocation4 [shape = 's32[1]{0}', space=sflag, size = 0x4, scoped, tag = 'scoped memory for tpu_custom_call.1']
    #allocation5 [shape = 'u8[2048]{0}', space=vmem, size = 0x800, scoped, tag = 'input window, operand 1, single buffered']
    #allocation6 [shape = 's32[1]{0}', space=sflag, size = 0x4, scoped, tag = 'scoped memory for tpu_custom_call.1']
    #allocation7 [shape = 'u8[65536]{0}', space=vmem, size = 0x10000, scoped, tag = 'input window, operand 3, single buffered']
    #allocation8 [shape = 'u8[65536]{0}', space=vmem, size = 0x10000, scoped, tag = 'input window, operand 5, single buffered']
    #allocation9 [shape = 's32[1]{0}', space=sflag, size = 0x4, scoped, tag = 'scoped memory for tpu_custom_call.1']
    #allocation10 [shape = 'u8[4096]{0}', space=vmem, size = 0x1000, scoped, tag = 'output window, operand 0, single buffered']
    %12 = vsyncpa [#allocation3], 0
    %13 = vsyncpa [#allocation6], 0
    %14 = vsyncpa [#allocation9], 0
    %15 = vsyncpa [#allocation4], 0
    // Predicated region
    $region2: #{tpu_custom_call.1} parent=1 // pred_check
      _
    $region3: #{tpu_custom_call.1} parent=1 // pred_check_branch
      %17 = sbr.rel (0) target = $region5
    $region4: #{tpu_custom_call.1} parent=1 // pred_region
      %s19 = ssub.s32 128, 32
      %20 = vsyncadd [#allocation3], %s19
      %s21 = sshll.u32 [#allocation2], 4
      %s22 = int_to_ptr.vmem [resolvable:$true] %s21
      %27 = dma.hbm_to_vmem [thread:$0]  %s0, 32, %s22, [#allocation3], 32, 32, 2
    $region5: #{tpu_custom_call.1} parent=1 // pred_fallthru
      _
    // Predicated region
    $region6: #{tpu_custom_call.1} parent=1 // pred_check
      _
    $region7: #{tpu_custom_call.1} parent=1 // pred_check_branch
      %29 = sbr.rel (0) target = $region9
    $region8: #{tpu_custom_call.1} parent=1 // pred_region
      %s31 = ssub.s32 64, 64
      %32 = vsyncadd [#allocation6], %s31
      %s34 = sshll.u32 [#allocation5], 4
      %s35 = int_to_ptr.vmem [resolvable:$true] %s34
      %37 = dma.hbm_to_vmem [thread:$0]  %s1, 64, %s35, [#allocation6]
    $region9: #{tpu_custom_call.1} parent=1 // pred_fallthru
      _
    // Predicated region
    $region10: #{tpu_custom_call.1} parent=1 // pred_check
      _
    $region11: #{tpu_custom_call.1} parent=1 // pred_check_branch
      %39 = sbr.rel (0) target = $region13
    $region12: #{tpu_custom_call.1} parent=1 // pred_region
      _
    $region13: #{tpu_custom_call.1} parent=1 // pred_fallthru
      _
    // Predicated region
    $region14: #{tpu_custom_call.1} parent=1 // pred_check
      _
    $region15: #{tpu_custom_call.1} parent=1 // pred_check_branch
      %41 = sbr.rel (0) target = $region17
    $region16: #{tpu_custom_call.1} parent=1 // pred_region
      %s43 = ssub.s32 2048, 2048
      %44 = vsyncadd [#allocation6], %s43
      %s45 = sshll.u32 [#allocation7], 4
      %s46 = int_to_ptr.vmem [resolvable:$true] %s45
      %51 = dma.hbm_to_vmem [thread:$0]  %s3, 2048, %s46, [#allocation6], 128, 128, 8
    $region17: #{tpu_custom_call.1} parent=1 // pred_fallthru
      _
    // Predicated region
    $region18: #{tpu_custom_call.1} parent=1 // pred_check
      _
    $region19: #{tpu_custom_call.1} parent=1 // pred_check_branch
      %53 = sbr.rel (0) target = $region21
    $region20: #{tpu_custom_call.1} parent=1 // pred_region
      _
    $region21: #{tpu_custom_call.1} parent=1 // pred_fallthru
      _
    // Predicated region
    $region22: #{tpu_custom_call.1} parent=1 // pred_check
      _
    $region23: #{tpu_custom_call.1} parent=1 // pred_check_branch
      %55 = sbr.rel (0) target = $region25
    $region24: #{tpu_custom_call.1} parent=1 // pred_region
      %s57 = ssub.s32 2048, 2048
      %58 = vsyncadd [#allocation9], %s57
      %s59 = sshll.u32 [#allocation8], 4
      %s60 = int_to_ptr.vmem [resolvable:$true] %s59
      %65 = dma.hbm_to_vmem [thread:$0]  %s5, 2048, %s60, [#allocation9], 64, 64, 4
    $region25: #{tpu_custom_call.1} parent=1 // pred_fallthru
      _
    // Predicated region
    $region26: #{tpu_custom_call.1} parent=1 // pred_check
      _
    $region27: #{tpu_custom_call.1} parent=1 // pred_check_branch
      %67 = sbr.rel (0) target = $region29
    $region28: #{tpu_custom_call.1} parent=1 // pred_region
      _
    $region29: #{tpu_custom_call.1} parent=1 // pred_fallthru
      _
    // Predicated region
    $region30: #{tpu_custom_call.1} parent=1 // pred_check
      _
    $region31: #{tpu_custom_call.1} parent=1 // pred_check_branch
      %69 = sbr.rel (0) target = $region33
    $region32: #{tpu_custom_call.1} parent=1 // pred_region
      %70 = dma.done [#allocation3], 128
    $region33: #{tpu_custom_call.1} parent=1 // pred_fallthru
      _
    // Predicated region
    $region34: #{tpu_custom_call.1} parent=1 // pred_check
      _
    $region35: #{tpu_custom_call.1} parent=1 // pred_check_branch
      %72 = sbr.rel (0) target = $region37
    $region36: #{tpu_custom_call.1} parent=1 // pred_region
      %73 = dma.done [#allocation6], 64
    $region37: #{tpu_custom_call.1} parent=1 // pred_fallthru
      _
    // Predicated region
    $region38: #{tpu_custom_call.1} parent=1 // pred_check
      _
    $region39: #{tpu_custom_call.1} parent=1 // pred_check_branch
      %75 = sbr.rel (0) target = $region41
    $region40: #{tpu_custom_call.1} parent=1 // pred_region
      %76 = dma.done [#allocation6], 2048
    $region41: #{tpu_custom_call.1} parent=1 // pred_fallthru
      _
    // Predicated region
    $region42: #{tpu_custom_call.1} parent=1 // pred_check
      _
    $region43: #{tpu_custom_call.1} parent=1 // pred_check_branch
      %78 = sbr.rel (0) target = $region45
    $region44: #{tpu_custom_call.1} parent=1 // pred_region
      %79 = dma.done [#allocation9], 2048
    $region45: #{tpu_custom_call.1} parent=1 // pred_fallthru
      _
    %v81 = vld [vmem:[#allocation2] sm:$0xff]
    %v82 = vpack.c.bf16 %v81, %v81
    %v83 = vld [vmem:[#allocation5] sm:$0xf]
    %v84 = vld [vmem:[%s2] sm:$0x1]
    %v86 = vlaneseq
    %v87 = vshrl.u32 %v86, 7
    %v88 = vsub.s32 0, %v87
    %v89 = vrot.slane %v84, %v88
    %vm91 = vcmask 64512
    %v93 = vsel %vm91, %v82, 0
    %vm95 = vcmask 1043456
    %v97 = vsel %vm95, %v83, 0
    %99 = vmatprep.subr.bf16.mxu0 0
    %100 = vmatpush1.bf16.msra.mxu0 %v97
    %101 = vmatprep.subr.bf16.mxu0 0
    %102 = vmatpush1.bf16.msra.mxu0 0
    %103 = vmatprep.subr.bf16.mxu0 0
    %104 = vmatpush1.bf16.msra.mxu0 0
    %105 = vmatprep.subr.bf16.mxu0 0
    %106 = vmatpush1.bf16.msra.mxu0 0
    %107 = vmatprep.subr.bf16.mxu0 0
    %108 = vmatpush1.bf16.msra.mxu0 0
    %109 = vmatprep.subr.bf16.mxu0 0
    %110 = vmatpush1.bf16.msra.mxu0 0
    %111 = vmatprep.subr.bf16.mxu0 0
    %112 = vmatpush1.bf16.msra.mxu0 0
    %113 = vmatprep.subr.bf16.mxu0 0
    %114 = vmatpush1.bf16.msra.mxu0 0
    %115 = vmatprep.subr.bf16.mxu0 0
    %116 = vmatpush1.bf16.msra.mxu0 0
    %117 = vmatprep.subr.bf16.mxu0 0
    %118 = vmatpush1.bf16.msra.mxu0 0
    %119 = vmatprep.subr.bf16.mxu0 0
    %120 = vmatpush1.bf16.msra.mxu0 0
    %121 = vmatprep.subr.bf16.mxu0 0
    %122 = vmatpush1.bf16.msra.mxu0 0
    %123 = vmatprep.subr.bf16.mxu0 0
    %124 = vmatpush1.bf16.msra.mxu0 0
    %125 = vmatprep.subr.bf16.mxu0 0
    %126 = vmatpush1.bf16.msra.mxu0 0
    %127 = vmatprep.subr.bf16.mxu0 0
    %128 = vmatpush1.bf16.msra.mxu0 0
    %129 = vmatprep.subr.bf16.mxu0 0
    %130 = vmatpush1.bf16.msra.mxu0 0
    %131 = vmatprep.mubr.bf16.mxu0 0
    %132 = vmatmul.mubr.bf16.gmra.mrb[0].mxu0 %v93
    %v133 = vpop.f32.mrb[0].mxu0
    %v134 = vadd.f32 %v89, %v133
    %v135 = vpop.f32.mrb[0].mxu0
    %v136 = vpop.f32.mrb[0].mxu0
    %v137 = vpop.f32.mrb[0].mxu0
    %138 = vdwg.mxu0
    %v139 = vmax.f32 %v134, 0.0
    %v140 = vpack.c.bf16 %v139, %v139
    %v141 = vld [vmem:[#allocation7] sm:$0xff]
    %v142 = vld [vmem:[#allocation7 + $0x8] sm:$0xff]
    %v143 = vld [vmem:[#allocation7 + $0x10] sm:$0xff]
    %v144 = vld [vmem:[#allocation7 + $0x18] sm:$0xff]
    %v145 = vld [vmem:[#allocation7 + $0x20] sm:$0xff]
    %v146 = vld [vmem:[#allocation7 + $0x28] sm:$0xff]
    %v147 = vld [vmem:[#allocation7 + $0x30] sm:$0xff]
    %v148 = vld [vmem:[#allocation7 + $0x38] sm:$0xff]
    %v149 = vld [vmem:[#allocation7 + $0x40] sm:$0xff]
    %v150 = vld [vmem:[#allocation7 + $0x48] sm:$0xff]
    %v151 = vld [vmem:[#allocation7 + $0x50] sm:$0xff]
    %v152 = vld [vmem:[#allocation7 + $0x58] sm:$0xff]
    %v153 = vld [vmem:[#allocation7 + $0x60] sm:$0xff]
    %v154 = vld [vmem:[#allocation7 + $0x68] sm:$0xff]
    %v155 = vld [vmem:[#allocation7 + $0x70] sm:$0xff]
    %v156 = vld [vmem:[#allocation7 + $0x78] sm:$0xff]
    %v157 = vld [vmem:[%s4] sm:$0x3]
    %v159 = vlaneseq
    %v160 = vshrl.u32 %v159, 7
    %v161 = vsub.s32 0, %v160
    %v162 = vrot.slane %v157, %v161
    %v163 = vlaneseq
    %v164 = vshrl.u32 %v163, 7
    %v165 = vsub.s32 1, %v164
    %v166 = vrot.slane %v157, %v165
    %v185 = vunpack.c.l.b16 %v141
    %v186 = vunpack.c.h.b16 %v141
    %v187 = vunpack.c.l.b16 %v142
    %v188 = vunpack.c.h.b16 %v142
    %v189 = vunpack.c.l.b16 %v143
    %v190 = vunpack.c.h.b16 %v143
    %v191 = vunpack.c.l.b16 %v144
    %v192 = vunpack.c.h.b16 %v144
    %v193 = vunpack.c.l.b16 %v145
    %v194 = vunpack.c.h.b16 %v145
    %v195 = vunpack.c.l.b16 %v146
    %v196 = vunpack.c.h.b16 %v146
    %v197 = vunpack.c.l.b16 %v147
    %v198 = vunpack.c.h.b16 %v147
    %v199 = vunpack.c.l.b16 %v148
    %v200 = vunpack.c.h.b16 %v148
    %v201 = vunpack.c.l.b16 %v149
    %v202 = vunpack.c.h.b16 %v149
    %v203 = vunpack.c.l.b16 %v150
    %v204 = vunpack.c.h.b16 %v150
    %v205 = vunpack.c.l.b16 %v151
    %v206 = vunpack.c.h.b16 %v151
    %v207 = vunpack.c.l.b16 %v152
    %v208 = vunpack.c.h.b16 %v152
    %v209 = vunpack.c.l.b16 %v153
    %v210 = vunpack.c.h.b16 %v153
    %v211 = vunpack.c.l.b16 %v154
    %v212 = vunpack.c.h.b16 %v154
    %v213 = vunpack.c.l.b16 %v155
    %v214 = vunpack.c.h.b16 %v155
    %v215 = vunpack.c.l.b16 %v156
    %v216 = vunpack.c.h.b16 %v156
    %v217 = vpack.c.b16 %v187, %v185
    %v218 = vpack.c.b16 %v188, %v186
    %v219 = vpack.c.b16 %v191, %v189
    %v220 = vpack.c.b16 %v192, %v190
    %v221 = vpack.c.b16 %v195, %v193
    %v222 = vpack.c.b16 %v196, %v194
    %v223 = vpack.c.b16 %v199, %v197
    %v224 = vpack.c.b16 %v200, %v198
    %v225 = vpack.c.b16 %v203, %v201
    %v226 = vpack.c.b16 %v204, %v202
    %v227 = vpack.c.b16 %v207, %v205
    %v228 = vpack.c.b16 %v208, %v206
    %v229 = vpack.c.b16 %v211, %v209
    %v230 = vpack.c.b16 %v212, %v210
    %v231 = vpack.c.b16 %v215, %v213
    %v232 = vpack.c.b16 %v216, %v214
    %249 = vmatprep.subr.bf16.mxu0 %v218
    %250 = vmatpush1.bf16.msra.mxu0 %v217
    %251 = vmatprep.subr.bf16.mxu0 %v220
    %252 = vmatpush1.bf16.msra.mxu0 %v219
    %253 = vmatprep.subr.bf16.mxu0 %v222
    %254 = vmatpush1.bf16.msra.mxu0 %v221
    %255 = vmatprep.subr.bf16.mxu0 %v224
    %256 = vmatpush1.bf16.msra.mxu0 %v223
    %257 = vmatprep.subr.bf16.mxu0 %v226
    %258 = vmatpush1.bf16.msra.mxu0 %v225
    %259 = vmatprep.subr.bf16.mxu0 %v228
    %260 = vmatpush1.bf16.msra.mxu0 %v227
    %261 = vmatprep.subr.bf16.mxu0 %v230
    %262 = vmatpush1.bf16.msra.mxu0 %v229
    %263 = vmatprep.subr.bf16.mxu0 %v232
    %264 = vmatpush1.bf16.msra.mxu0 %v231
    %265 = vmatprep.subr.bf16.mxu0 0
    %266 = vmatpush1.bf16.msra.mxu0 0
    %267 = vmatprep.subr.bf16.mxu0 0
    %268 = vmatpush1.bf16.msra.mxu0 0
    %269 = vmatprep.subr.bf16.mxu0 0
    %270 = vmatpush1.bf16.msra.mxu0 0
    %271 = vmatprep.subr.bf16.mxu0 0
    %272 = vmatpush1.bf16.msra.mxu0 0
    %273 = vmatprep.subr.bf16.mxu0 0
    %274 = vmatpush1.bf16.msra.mxu0 0
    %275 = vmatprep.subr.bf16.mxu0 0
    %276 = vmatpush1.bf16.msra.mxu0 0
    %277 = vmatprep.subr.bf16.mxu0 0
    %278 = vmatpush1.bf16.msra.mxu0 0
    %279 = vmatprep.subr.bf16.mxu0 0
    %280 = vmatpush1.bf16.msra.mxu0 0
    %281 = vmatprep.mubr.bf16.mxu0 0
    %282 = vmatmul.mubr.bf16.gmra.mrb[0].mxu0 %v140
    %v283 = vpop.f32.mrb[0].mxu0
    %v284 = vadd.f32 %v162, %v283
    %v285 = vpop.f32.mrb[0].mxu0
    %v286 = vadd.f32 %v166, %v285
    %v287 = vpop.f32.mrb[0].mxu0
    %v288 = vpop.f32.mrb[0].mxu0
    %289 = vdwg.mxu0
    %v290 = vmax.f32 %v284, 0.0
    %v291 = vmax.f32 %v286, 0.0
    %v292 = vpack.c.bf16 %v290, %v290
    %v293 = vpack.c.bf16 %v291, %v291
    %v294 = vld [vmem:[#allocation8] sm:$0xf]
    %v295 = vld [vmem:[#allocation8 + $0x4] sm:$0xf]
    %v296 = vld [vmem:[#allocation8 + $0x8] sm:$0xf]
    %v297 = vld [vmem:[#allocation8 + $0xc] sm:$0xf]
    %v298 = vld [vmem:[#allocation8 + $0x10] sm:$0xf]
    %v299 = vld [vmem:[#allocation8 + $0x14] sm:$0xf]
    %v300 = vld [vmem:[#allocation8 + $0x18] sm:$0xf]
    %v301 = vld [vmem:[#allocation8 + $0x1c] sm:$0xf]
    %v302 = vld [vmem:[#allocation8 + $0x20] sm:$0xf]
    %v303 = vld [vmem:[#allocation8 + $0x24] sm:$0xf]
    %v304 = vld [vmem:[#allocation8 + $0x28] sm:$0xf]
    %v305 = vld [vmem:[#allocation8 + $0x2c] sm:$0xf]
    %v306 = vld [vmem:[#allocation8 + $0x30] sm:$0xf]
    %v307 = vld [vmem:[#allocation8 + $0x34] sm:$0xf]
    %v308 = vld [vmem:[#allocation8 + $0x38] sm:$0xf]
    %v309 = vld [vmem:[#allocation8 + $0x3c] sm:$0xf]
    %v310 = vld [vmem:[#allocation8 + $0x40] sm:$0xf]
    %v311 = vld [vmem:[#allocation8 + $0x44] sm:$0xf]
    %v312 = vld [vmem:[#allocation8 + $0x48] sm:$0xf]
    %v313 = vld [vmem:[#allocation8 + $0x4c] sm:$0xf]
    %v314 = vld [vmem:[#allocation8 + $0x50] sm:$0xf]
    %v315 = vld [vmem:[#allocation8 + $0x54] sm:$0xf]
    %v316 = vld [vmem:[#allocation8 + $0x58] sm:$0xf]
    %v317 = vld [vmem:[#allocation8 + $0x5c] sm:$0xf]
    %v318 = vld [vmem:[#allocation8 + $0x60] sm:$0xf]
    %v319 = vld [vmem:[#allocation8 + $0x64] sm:$0xf]
    %v320 = vld [vmem:[#allocation8 + $0x68] sm:$0xf]
    %v321 = vld [vmem:[#allocation8 + $0x6c] sm:$0xf]
    %v322 = vld [vmem:[#allocation8 + $0x70] sm:$0xf]
    %v323 = vld [vmem:[#allocation8 + $0x74] sm:$0xf]
    %v324 = vld [vmem:[#allocation8 + $0x78] sm:$0xf]
    %v325 = vld [vmem:[#allocation8 + $0x7c] sm:$0xf]
    %v326 = vld [vmem:[%s6] sm:$0x1]
    %v328 = vlaneseq
    %v329 = vshrl.u32 %v328, 7
    %v330 = vsub.s32 0, %v329
    %v331 = vrot.slane %v326, %v330
    %v365 = vunpack.c.l.b16 %v294
    %v366 = vunpack.c.l.b16 %v295
    %v367 = vunpack.c.l.b16 %v296
    %v368 = vunpack.c.l.b16 %v297
    %v369 = vunpack.c.l.b16 %v298
    %v370 = vunpack.c.l.b16 %v299
    %v371 = vunpack.c.l.b16 %v300
    %v372 = vunpack.c.l.b16 %v301
    %v373 = vunpack.c.l.b16 %v302
    %v374 = vunpack.c.l.b16 %v303
    %v375 = vunpack.c.l.b16 %v304
    %v376 = vunpack.c.l.b16 %v305
    %v377 = vunpack.c.l.b16 %v306
    %v378 = vunpack.c.l.b16 %v307
    %v379 = vunpack.c.l.b16 %v308
    %v380 = vunpack.c.l.b16 %v309
    %v381 = vunpack.c.l.b16 %v310
    %v382 = vunpack.c.l.b16 %v311
    %v383 = vunpack.c.l.b16 %v312
    %v384 = vunpack.c.l.b16 %v313
    %v385 = vunpack.c.l.b16 %v314
    %v386 = vunpack.c.l.b16 %v315
    %v387 = vunpack.c.l.b16 %v316
    %v388 = vunpack.c.l.b16 %v317
    %v389 = vunpack.c.l.b16 %v318
    %v390 = vunpack.c.l.b16 %v319
    %v391 = vunpack.c.l.b16 %v320
    %v392 = vunpack.c.l.b16 %v321
    %v393 = vunpack.c.l.b16 %v322
    %v394 = vunpack.c.l.b16 %v323
    %v395 = vunpack.c.l.b16 %v324
    %v396 = vunpack.c.l.b16 %v325
    %v397 = vpack.c.b16 %v366, %v365
    %v398 = vpack.c.b16 %v368, %v367
    %v399 = vpack.c.b16 %v370, %v369
    %v400 = vpack.c.b16 %v372, %v371
    %v401 = vpack.c.b16 %v374, %v373
    %v402 = vpack.c.b16 %v376, %v375
    %v403 = vpack.c.b16 %v378, %v377
    %v404 = vpack.c.b16 %v380, %v379
    %v405 = vpack.c.b16 %v382, %v381
    %v406 = vpack.c.b16 %v384, %v383
    %v407 = vpack.c.b16 %v386, %v385
    %v408 = vpack.c.b16 %v388, %v387
    %v409 = vpack.c.b16 %v390, %v389
    %v410 = vpack.c.b16 %v392, %v391
    %v411 = vpack.c.b16 %v394, %v393
    %v412 = vpack.c.b16 %v396, %v395
    %429 = vmatprep.subr.bf16.mxu0 0
    %430 = vmatpush1.bf16.msra.mxu0 %v397
    %431 = vmatprep.subr.bf16.mxu0 0
    %432 = vmatpush1.bf16.msra.mxu0 %v398
    %433 = vmatprep.subr.bf16.mxu0 0
    %434 = vmatpush1.bf16.msra.mxu0 %v399
    %435 = vmatprep.subr.bf16.mxu0 0
    %436 = vmatpush1.bf16.msra.mxu0 %v400
    %437 = vmatprep.subr.bf16.mxu0 0
    %438 = vmatpush1.bf16.msra.mxu0 %v401
    %439 = vmatprep.subr.bf16.mxu0 0
    %440 = vmatpush1.bf16.msra.mxu0 %v402
    %441 = vmatprep.subr.bf16.mxu0 0
    %442 = vmatpush1.bf16.msra.mxu0 %v403
    %443 = vmatprep.subr.bf16.mxu0 0
    %444 = vmatpush1.bf16.msra.mxu0 %v404
    %445 = vmatprep.subr.bf16.mxu0 0
    %446 = vmatpush1.bf16.msra.mxu0 %v405
    %447 = vmatprep.subr.bf16.mxu0 0
    %448 = vmatpush1.bf16.msra.mxu0 %v406
    %449 = vmatprep.subr.bf16.mxu0 0
    %450 = vmatpush1.bf16.msra.mxu0 %v407
    %451 = vmatprep.subr.bf16.mxu0 0
    %452 = vmatpush1.bf16.msra.mxu0 %v408
    %453 = vmatprep.subr.bf16.mxu0 0
    %454 = vmatpush1.bf16.msra.mxu0 %v409
    %455 = vmatprep.subr.bf16.mxu0 0
    %456 = vmatpush1.bf16.msra.mxu0 %v410
    %457 = vmatprep.subr.bf16.mxu0 0
    %458 = vmatpush1.bf16.msra.mxu0 %v411
    %459 = vmatprep.subr.bf16.mxu0 0
    %460 = vmatpush1.bf16.msra.mxu0 %v412
    %461 = vmatprep.mubr.bf16.mxu0 %v293
    %462 = vmatmul.mubr.bf16.gmra.mrb[0].mxu0 %v292
    %v463 = vpop.f32.mrb[0].mxu0
    %v464 = vadd.f32 %v331, %v463
    %v465 = vpop.f32.mrb[0].mxu0
    %v466 = vpop.f32.mrb[0].mxu0
    %v467 = vpop.f32.mrb[0].mxu0
    %468 = vdwg.mxu0
    %vm469 = vcmask 39936
    %470 = vst.msk [vmem:[#allocation10] sm:$0xff] %vm469, %v464
    // Predicated region
    $region46: #{tpu_custom_call.1} parent=1 // pred_check
      _
    $region47: #{tpu_custom_call.1} parent=1 // pred_check_branch
      %472 = sbr.rel (0) target = $region49
    $region48: #{tpu_custom_call.1} parent=1 // pred_region
      %s474 = ssub.s32 128, 32
      %475 = vsyncadd [#allocation4], %s474
      %s476 = sshll.u32 [#allocation10], 4
      %s477 = int_to_ptr.vmem [resolvable:$true] %s476
      %482 = dma.vmem_to_hbm [thread:$0]  %s477, 32, %s7, [#allocation4], 32, 32, 2
    $region49: #{tpu_custom_call.1} parent=1 // pred_fallthru
      _
    // Predicated region
    $region50: #{tpu_custom_call.1} parent=1 // pred_check
      _
    $region51: #{tpu_custom_call.1} parent=1 // pred_check_branch
      %484 = sbr.rel (0) target = $region53
    $region52: #{tpu_custom_call.1} parent=1 // pred_region
      %485 = dma.done [#allocation4], 128
    $region53: #{tpu_custom_call.1} parent=1 // pred_fallthru
      _
    %486 = vsyncpa [#allocation3], 1
    %487 = vsyncpa [#allocation6], 1
    %488 = vsyncpa [#allocation9], 1
    %489 = vsyncpa [#allocation4], 1

</llo_original>
